<compile_context>
chip_gen: v7x
topology: tpu7x:2x2x1
jax: 0.10.0
libtpu: 0.0.40
codegen_flags: <defaults>
</compile_context>

<pallas_src>
import functools

import jax
import jax.numpy as jnp
from jax.experimental import pallas as pl
from jax.experimental.pallas import tpu as pltpu

# Explicit scoped-VMEM budget: default on v6e/v7x (and well under v5e/v6e/v7x physical).
_SCOPED_VMEM_BYTES = 32 * 1024 * 1024


def _round_up(x, m):
    return ((x + m - 1) // m) * m


def _tile_bytes(shape, dtype):
    n = 1
    for d in shape:
        n *= int(d)
    return n * jnp.dtype(dtype).itemsize


def _pick_batch_tile(batch, sublane):
    """Batch tile: tiny batch -> 1 tile; moderate -> >=2 tiles (both v7x TCs);
    large -> 256-row tiles (v6e 256-wide MXU, few grid steps)."""
    if batch <= 2 * sublane:
        return _round_up(max(batch, 1), sublane)
    if batch <= 512:
        return _round_up(pl.cdiv(batch, 2), sublane)
    return 256


def _fused_dqn_kernel(x_ref, w0_ref, wmid_ref, wout_ref, bh_ref, bo_ref, o_ref, *,
                      n_mid):
    """Whole MLP in one kernel: MXU matmuls (bf16/f32 in, f32 accumulate) + f32
    bias/ReLU epilogue on the VPU; intermediate activations never leave vregs/VMEM."""
    # Input layer: narrow-K contraction (K = padded n_observations).
    h = jnp.dot(x_ref[...], w0_ref[...], preferred_element_type=jnp.float32)
    h = jnp.maximum(h + bh_ref[0], 0.0)
    # Hidden layers: unrolled at trace time (small, fixed count).
    for l in range(n_mid):
        y = jnp.dot(h.astype(wmid_ref.dtype), wmid_ref[l],
                    preferred_element_type=jnp.float32)
        h = jnp.maximum(y + bh_ref[l + 1], 0.0)
    # Output layer: narrow-N (n_actions) matmul, no ReLU; store only the true lanes.
    q = jnp.dot(h.astype(wout_ref.dtype), wout_ref[...],
                preferred_element_type=jnp.float32)
    o_ref[...] = (q + bo_ref[...]).astype(o_ref.dtype)


def pack_dqn_params(params, compute_dtype=jnp.bfloat16):
    """Pack parameters ONCE (hoisted off the hot path).

    Weights are stored in `compute_dtype` (bf16 by default -> MXU-native, half the
    VMEM residency); biases stay f32 so the epilogue is f32 on every generation.
    Only the sublane/contraction axes are padded to 8/16 and the hidden lane axis to
    128; the true n_observations / n_actions widths are kept where possible.
    """
    compute_dtype = jnp.dtype(compute_dtype)
    n_layers = len(params)
    assert n_layers >= 2, "DQN has at least input_layer and output_layer"
    n_obs, hidden = params[0][0].shape
    n_actions = params[-1][0].shape[1]
    n_mid = n_layers - 2

    sublane = 16 if compute_dtype == jnp.dtype(jnp.bfloat16) else 8
    n_obs_pad = _round_up(n_obs, sublane)   # contraction axis only needs sublane align
    h_pad = _round_up(hidden, 128)          # hidden lane axis must be lane-dense

    w0 = jnp.zeros((n_obs_pad, h_pad), compute_dtype)
    w0 = w0.at[:n_obs, :hidden].set(params[0][0].astype(compute_dtype))

    # Dummy single layer when there are no hidden layers (unused by the kernel).
    n_mid_eff = max(n_mid, 1)
    w_mid = jnp.zeros((n_mid_eff, h_pad, h_pad), compute_dtype)
    for l in range(n_mid):
        w_mid = w_mid.at[l, :hidden, :hidden].set(params[1 + l][0].astype(compute_dtype))

    w_out = jnp.zeros((h_pad, n_actions), compute_dtype)
    w_out = w_out.at[:hidden, :].set(params[-1][0].astype(compute_dtype))

    b_hid = jnp.zeros((n_mid + 1, 1, h_pad), jnp.float32)
    for l in range(n_mid + 1):
        b = params[l][1].reshape(1, -1).astype(jnp.float32)
        b_hid = b_hid.at[l, :, :hidden].set(b)
    b_out = params[-1][1].reshape(1, n_actions).astype(jnp.float32)

    return dict(w0=w0, w_mid=w_mid, w_out=w_out, b_hid=b_hid, b_out=b_out)


@jax.jit
def dqn_forward(packed, x):
    """Forward pass of DQN: relu(input_layer), relu(hidden)*, output_layer (no relu)."""
    w0, w_mid, w_out = packed["w0"], packed["w_mid"], packed["w_out"]
    b_hid, b_out = packed["b_hid"], packed["b_out"]

    B, n_obs = x.shape
    n_obs_pad, h_pad = w0.shape
    n_actions = w_out.shape[1]
    n_mid = b_hid.shape[0] - 1
    n_mid_eff = w_mid.shape[0]
    compute_dtype = w0.dtype
    sublane = 16 if compute_dtype == jnp.dtype(jnp.bfloat16) else 8

    tb = _pick_batch_tile(B, sublane)
    b_pad = _round_up(B, tb)

    # Cast to the compute dtype; pad only the batch rows / sublane-aligned feature
    # axis (NOT to 128 lanes).  Zero padding keeps padded math exact.
    x_in = x.astype(compute_dtype)
    if (b_pad, n_obs_pad) != (B, n_obs):
        x_in = jnp.zeros((b_pad, n_obs_pad), compute_dtype).at[:B, :n_obs].set(x_in)

    out_dtype = x.dtype

    # VMEM residency estimate: Pallas double-buffers EVERY input and output block.
    vmem_est = 2 * (
        _tile_bytes((tb, n_obs_pad), compute_dtype)
        + _tile_bytes(w0.shape, w0.dtype)
        + _tile_bytes(w_mid.shape, w_mid.dtype)
        + _tile_bytes(w_out.shape, w_out.dtype)
        + _tile_bytes(b_hid.shape, b_hid.dtype)
        + _tile_bytes(b_out.shape, b_out.dtype)
        + _tile_bytes((tb, n_actions), out_dtype)
    )
    # TODO(synk): when the resident weights outgrow this budget (big hidden sizes),
    # switch to per-layer weight DMA (pipeline_mode=pl.Buffered(1) on the constant-index
    # weight specs / manual double-buffering) instead of the fully resident plan.
    assert vmem_est <= _SCOPED_VMEM_BYTES, (
        "fused VMEM-resident DQN plan exceeds the scoped VMEM budget")

    kernel = functools.partial(_fused_dqn_kernel, n_mid=n_mid)
    out = pl.pallas_call(
        kernel,
        out_shape=jax.ShapeDtypeStruct((b_pad, n_actions), out_dtype),
        grid=(b_pad // tb,),
        in_specs=[
            # Batch-tiled activations, true (narrow) feature width.
            pl.BlockSpec((tb, n_obs_pad), lambda i: (i, 0)),
            # Weights / biases: constant index_map -> VMEM-resident across batch tiles.
            pl.BlockSpec((n_obs_pad, h_pad), lambda i: (0, 0)),
            pl.BlockSpec((n_mid_eff, h_pad, h_pad), lambda i: (0, 0, 0)),
            pl.BlockSpec((h_pad, n_actions), lambda i: (0, 0)),
            pl.BlockSpec((n_mid + 1, 1, h_pad), lambda i: (0, 0, 0)),
            pl.BlockSpec((1, n_actions), lambda i: (0, 0)),
        ],
        # Narrow, true-width output: 4 lanes instead of 128 -> 32x less writeback.
        out_specs=pl.BlockSpec((tb, n_actions), lambda i: (i, 0)),
        compiler_params=pltpu.CompilerParams(
            dimension_semantics=("parallel",),          # shard batch tiles across TCs
            vmem_limit_bytes=_SCOPED_VMEM_BYTES,
        ),
    )(x_in, w0, w_mid, w_out, b_hid, b_out)

    return out[:B]  # drop padded batch rows


def init_dqn_params(key, n_observations, n_actions, n_hidden_layers,
                    hidden_layer_len, dtype=jnp.float32):
    """Deterministic init mimicking PyTorch nn.Linear default (U[-1/sqrt(fan_in), +])."""
    dims = ([n_observations] + [hidden_layer_len] * (n_hidden_layers + 1)
            + [n_actions])
    params = []
    for fan_in, fan_out in zip(dims[:-1], dims[1:]):
        key, kw, kb = jax.random.split(key, 3)
        bound = 1.0 / (fan_in ** 0.5)
        w = jax.random.uniform(kw, (fan_in, fan_out), dtype, -bound, bound)
        b = jax.random.uniform(kb, (1, fan_out), dtype, -bound, bound)
        params.append((w, b))
    return params


def dqn_reference(params, x):
    h = x
    for i, (w, b) in enumerate(params):
        h = h @ w + b
        if i != len(params) - 1:
            h = jnp.maximum(h, 0.0)
    return h


if __name__ == "__main__":
    # Shapes consistent with the module: DQN(n_observations=16, n_actions=4,
    # n_hiden_layers=2, hidden_layer_len=32), batch=8.
    n_observations = 16
    n_actions = 4
    n_hidden_layers = 2
    hidden_layer_len = 32
    batch = 8

    key = jax.random.PRNGKey(0)
    key, kx = jax.random.split(key)
    x = jax.random.normal(kx, (batch, n_observations), jnp.float32)
    params = init_dqn_params(key, n_observations, n_actions,
                             n_hidden_layers, hidden_layer_len)

    ref = dqn_reference(params, x)

    # Exact-semantics check: f32 compute path vs pure-JAX f32 reference.
    packed_f32 = pack_dqn_params(params, compute_dtype=jnp.float32)
    out_f32 = jax.block_until_ready(dqn_forward(packed_f32, x))
    assert out_f32.shape == (batch, n_actions)
    assert jnp.allclose(out_f32, ref, atol=1e-4, rtol=1e-4)

    # Production fast path: bf16 weights/activations on the MXU, f32 accumulate +
    # f32 bias/ReLU epilogue -> small, bounded rounding error vs the f32 reference.
    packed_bf16 = pack_dqn_params(params, compute_dtype=jnp.bfloat16)
    out_bf16 = jax.block_until_ready(dqn_forward(packed_bf16, x))
    assert out_bf16.shape == (batch, n_actions)
    assert jnp.allclose(out_bf16, ref, atol=5e-2, rtol=5e-2)

    print("KERNEL_OK")
</pallas_src>

<mosaic_0001>
module attributes {stable_mosaic.version = 11 : i64} {
  func.func @_fused_dqn_kernel(%arg0: i32, %arg1: memref<8x16xf32, #tpu.memory_space<vmem>>, %arg2: memref<16x128xf32, #tpu.memory_space<vmem>>, %arg3: memref<2x128x128xf32, #tpu.memory_space<vmem>>, %arg4: memref<128x4xf32, #tpu.memory_space<vmem>>, %arg5: memref<3x1x128xf32, #tpu.memory_space<vmem>>, %arg6: memref<1x4xf32, #tpu.memory_space<vmem>>, %arg7: memref<8x4xf32, #tpu.memory_space<vmem>>) attributes {dimension_semantics = [#tpu.dimension_semantics<parallel>], iteration_bounds = array<i64: 1>, scalar_prefetch = 0 : i64, scratch_operands = 0 : i64, tpu.core_type = #tpu.core_type<tc>, window_params = [{transform_indices = @transform_0, window_bounds = array<i64: 8, 16>}, {pipeline_mode = #tpu.pipeline_mode<synchronous>, transform_indices = @transform_1, window_bounds = array<i64: 16, 128>}, {pipeline_mode = #tpu.pipeline_mode<synchronous>, transform_indices = @transform_2, window_bounds = array<i64: 2, 128, 128>}, {pipeline_mode = #tpu.pipeline_mode<synchronous>, transform_indices = @transform_3, window_bounds = array<i64: 128, 4>}, {pipeline_mode = #tpu.pipeline_mode<synchronous>, transform_indices = @transform_4, window_bounds = array<i64: 3, 1, 128>}, {pipeline_mode = #tpu.pipeline_mode<synchronous>, transform_indices = @transform_5, window_bounds = array<i64: 1, 4>}, {transform_indices = @transform_6, window_bounds = array<i64: 8, 4>}]} {
    %c0 = arith.constant 0 : index
    %c0_0 = arith.constant 0 : index
    %0 = vector.load %arg1[%c0, %c0_0] : memref<8x16xf32, #tpu.memory_space<vmem>>, vector<8x16xf32>
    %c0_1 = arith.constant 0 : index
    %c0_2 = arith.constant 0 : index
    %1 = vector.load %arg2[%c0_1, %c0_2] : memref<16x128xf32, #tpu.memory_space<vmem>>, vector<16x128xf32>
    %cst = arith.constant dense<0.000000e+00> : vector<8x128xf32>
    %2 = tpu.matmul %0, %1, %cst {dimension_numbers = #tpu.dot_dimension_numbers<[1], [0], [0], [1], [0, 0, 1, 1], [], []>} : vector<8x16xf32>, vector<16x128xf32>, vector<8x128xf32> -> vector<8x128xf32>
    %c0_3 = arith.constant 0 : index
    %c0_4 = arith.constant 0 : index
    %c0_5 = arith.constant 0 : index
    %3 = vector.load %arg5[%c0_3, %c0_4, %c0_5] : memref<3x1x128xf32, #tpu.memory_space<vmem>>, vector<1x1x128xf32>
    %4 = vector.shape_cast %3 : vector<1x1x128xf32> to vector<1x128xf32>
    %5 = vector.broadcast %4 : vector<1x128xf32> to vector<8x128xf32>
    %6 = arith.addf %2, %5 : vector<8x128xf32>
    %cst_6 = arith.constant 0.000000e+00 : f32
    %7 = vector.broadcast %cst_6 : f32 to vector<8x128xf32>
    %8 = arith.maximumf %6, %7 : vector<8x128xf32>
    %c0_7 = arith.constant 0 : index
    %c0_8 = arith.constant 0 : index
    %c0_9 = arith.constant 0 : index
    %9 = vector.load %arg3[%c0_7, %c0_8, %c0_9] : memref<2x128x128xf32, #tpu.memory_space<vmem>>, vector<1x128x128xf32>
    %10 = vector.shape_cast %9 : vector<1x128x128xf32> to vector<128x128xf32>
    %cst_10 = arith.constant dense<0.000000e+00> : vector<8x128xf32>
    %11 = tpu.matmul %8, %10, %cst_10 {dimension_numbers = #tpu.dot_dimension_numbers<[1], [0], [0], [1], [0, 0, 1, 1], [], []>} : vector<8x128xf32>, vector<128x128xf32>, vector<8x128xf32> -> vector<8x128xf32>
    %c1 = arith.constant 1 : index
    %c0_11 = arith.constant 0 : index
    %c0_12 = arith.constant 0 : index
    %12 = vector.load %arg5[%c1, %c0_11, %c0_12] : memref<3x1x128xf32, #tpu.memory_space<vmem>>, vector<1x1x128xf32>
    %13 = vector.shape_cast %12 : vector<1x1x128xf32> to vector<1x128xf32>
    %14 = vector.broadcast %13 : vector<1x128xf32> to vector<8x128xf32>
    %15 = arith.addf %11, %14 : vector<8x128xf32>
    %cst_13 = arith.constant 0.000000e+00 : f32
    %16 = vector.broadcast %cst_13 : f32 to vector<8x128xf32>
    %17 = arith.maximumf %15, %16 : vector<8x128xf32>
    %c1_14 = arith.constant 1 : index
    %c0_15 = arith.constant 0 : index
    %c0_16 = arith.constant 0 : index
    %18 = vector.load %arg3[%c1_14, %c0_15, %c0_16] : memref<2x128x128xf32, #tpu.memory_space<vmem>>, vector<1x128x128xf32>
    %19 = vector.shape_cast %18 : vector<1x128x128xf32> to vector<128x128xf32>
    %cst_17 = arith.constant dense<0.000000e+00> : vector<8x128xf32>
    %20 = tpu.matmul %17, %19, %cst_17 {dimension_numbers = #tpu.dot_dimension_numbers<[1], [0], [0], [1], [0, 0, 1, 1], [], []>} : vector<8x128xf32>, vector<128x128xf32>, vector<8x128xf32> -> vector<8x128xf32>
    %c2 = arith.constant 2 : index
    %c0_18 = arith.constant 0 : index
    %c0_19 = arith.constant 0 : index
    %21 = vector.load %arg5[%c2, %c0_18, %c0_19] : memref<3x1x128xf32, #tpu.memory_space<vmem>>, vector<1x1x128xf32>
    %22 = vector.shape_cast %21 : vector<1x1x128xf32> to vector<1x128xf32>
    %23 = vector.broadcast %22 : vector<1x128xf32> to vector<8x128xf32>
    %24 = arith.addf %20, %23 : vector<8x128xf32>
    %cst_20 = arith.constant 0.000000e+00 : f32
    %25 = vector.broadcast %cst_20 : f32 to vector<8x128xf32>
    %26 = arith.maximumf %24, %25 : vector<8x128xf32>
    %c0_21 = arith.constant 0 : index
    %c0_22 = arith.constant 0 : index
    %27 = vector.load %arg4[%c0_21, %c0_22] : memref<128x4xf32, #tpu.memory_space<vmem>>, vector<128x4xf32>
    %cst_23 = arith.constant dense<0.000000e+00> : vector<8x4xf32>
    %28 = tpu.matmul %26, %27, %cst_23 {dimension_numbers = #tpu.dot_dimension_numbers<[1], [0], [0], [1], [0, 0, 1, 1], [], []>} : vector<8x128xf32>, vector<128x4xf32>, vector<8x4xf32> -> vector<8x4xf32>
    %c0_24 = arith.constant 0 : index
    %c0_25 = arith.constant 0 : index
    %29 = vector.load %arg6[%c0_24, %c0_25] : memref<1x4xf32, #tpu.memory_space<vmem>>, vector<1x4xf32>
    %30 = vector.broadcast %29 : vector<1x4xf32> to vector<8x4xf32>
    %31 = arith.addf %28, %30 : vector<8x4xf32>
    %c0_26 = arith.constant 0 : index
    %c0_27 = arith.constant 0 : index
    %32 = vector.load %arg7[%c0_26, %c0_27] : memref<8x4xf32, #tpu.memory_space<vmem>>, vector<8x4xf32>
    tpu.vector_store %arg7[%c0_26, %c0_27], %31 {strides = array<i32>} : memref<8x4xf32, #tpu.memory_space<vmem>>, vector<8x4xf32>,
    return
  }
  func.func @transform_0(%arg0: i32) -> (i32, i32) {
    %c0_i32 = arith.constant 0 : i32
    %c0_i32_0 = arith.constant 0 : i32
    return %arg0, %c0_i32 : i32, i32
  }
  func.func @transform_1(%arg0: i32) -> (i32, i32) {
    %c0_i32 = arith.constant 0 : i32
    %c0_i32_0 = arith.constant 0 : i32
    %c0_i32_1 = arith.constant 0 : i32
    return %c0_i32, %c0_i32_0 : i32, i32
  }
  func.func @transform_2(%arg0: i32) -> (i32, i32, i32) {
    %c0_i32 = arith.constant 0 : i32
    %c0_i32_0 = arith.constant 0 : i32
    %c0_i32_1 = arith.constant 0 : i32
    %c0_i32_2 = arith.constant 0 : i32
    return %c0_i32, %c0_i32_0, %c0_i32_1 : i32, i32, i32
  }
  func.func @transform_3(%arg0: i32) -> (i32, i32) {
    %c0_i32 = arith.constant 0 : i32
    %c0_i32_0 = arith.constant 0 : i32
    %c0_i32_1 = arith.constant 0 : i32
    return %c0_i32, %c0_i32_0 : i32, i32
  }
  func.func @transform_4(%arg0: i32) -> (i32, i32, i32) {
    %c0_i32 = arith.constant 0 : i32
    %c0_i32_0 = arith.constant 0 : i32
    %c0_i32_1 = arith.constant 0 : i32
    %c0_i32_2 = arith.constant 0 : i32
    return %c0_i32, %c0_i32_0, %c0_i32_1 : i32, i32, i32
  }
  func.func @transform_5(%arg0: i32) -> (i32, i32) {
    %c0_i32 = arith.constant 0 : i32
    %c0_i32_0 = arith.constant 0 : i32
    %c0_i32_1 = arith.constant 0 : i32
    return %c0_i32, %c0_i32_0 : i32, i32
  }
  func.func @transform_6(%arg0: i32) -> (i32, i32) {
    %c0_i32 = arith.constant 0 : i32
    %c0_i32_0 = arith.constant 0 : i32
    return %arg0, %c0_i32 : i32, i32
  }
}

</mosaic_0001>

<llo_original>
// kernel: dqn_forward.1
$region0: #{dqn_forward.1}
  #allocation0 [shape = 'u32[]', space=smem, size = 0x4, offset = 0x4, fixed_abs, tag = 'smem constant byte address 0x4 - core index']
  #allocation1 [shape = 'u32[144,128]{1,0:T(1,128)}', space=vmem, size = 0x12000, scoped, tag = 'internal scratch']
  %s0 = inlined_call_operand.vmem [shape: f32[8,16], index: 0, kind: input, shape index: {}]
  %s1 = inlined_call_operand.vmem [shape: f32[16,128], index: 1, kind: input, shape index: {}]
  %s2 = inlined_call_operand.hbm [shape: f32[2,128,128], index: 2, kind: input, shape index: {}]
  %s3 = inlined_call_operand.vmem [shape: f32[128,4], index: 3, kind: input, shape index: {}]
  %s4 = inlined_call_operand.vmem [shape: f32[3,1,128], index: 4, kind: input, shape index: {}]
  %s5 = inlined_call_operand.vmem [shape: f32[1,4], index: 5, kind: input, shape index: {}]
  %s6 = inlined_call_operand.vmem [shape: f32[8,4], index: 6, kind: output, shape index: {}]
  %s7 = sld [smem:[#allocation0]]
  $region38: #{dqn_forward.1} parent=0
    _
  %s9 = ssub.s32 1, %s7
  %s10 = scalar_select 0, %s9, %s7
  $region1: #{dqn_forward.1} parent=0
    #allocation2 [shape = 'u8[131072]{0}', space=vmem, size = 0x20000, scoped, tag = 'input window, operand 2, single buffered']
    #allocation3 [shape = 's32[1]{0}', space=sflag, size = 0x4, scoped, tag = 'scoped memory for dqn_forward.1']
    %11 = vsyncpa [#allocation3], 0
    // Predicated region
    $region2: #{dqn_forward.1} parent=1 // pred_check
      _
    $region3: #{dqn_forward.1} parent=1 // pred_check_branch
      %13 = sbr.rel (0) target = $region5
    $region4: #{dqn_forward.1} parent=1 // pred_region
      _
    $region5: #{dqn_forward.1} parent=1 // pred_fallthru
      _
    // Predicated region
    $region6: #{dqn_forward.1} parent=1 // pred_check
      _
    $region7: #{dqn_forward.1} parent=1 // pred_check_branch
      %15 = sbr.rel (0) target = $region9
    $region8: #{dqn_forward.1} parent=1 // pred_region
      _
    $region9: #{dqn_forward.1} parent=1 // pred_fallthru
      _
    // Predicated region
    $region10: #{dqn_forward.1} parent=1 // pred_check
      _
    $region11: #{dqn_forward.1} parent=1 // pred_check_branch
      %17 = sbr.rel (0) target = $region13
    $region12: #{dqn_forward.1} parent=1 // pred_region
      %s19 = ssub.s32 4096, 4096
      %20 = vsyncadd [#allocation3], %s19
      %s21 = sshll.u32 [#allocation2], 4
      %s22 = int_to_ptr.vmem [resolvable:$true] %s21
      %27 = dma.hbm_to_vmem [thread:$0]  %s2, 4096, %s22, [#allocation3], 128, 128, 8
    $region13: #{dqn_forward.1} parent=1 // pred_fallthru
      _
    // Predicated region
    $region14: #{dqn_forward.1} parent=1 // pred_check
      _
    $region15: #{dqn_forward.1} parent=1 // pred_check_branch
      %29 = sbr.rel (0) target = $region17
    $region16: #{dqn_forward.1} parent=1 // pred_region
      _
    $region17: #{dqn_forward.1} parent=1 // pred_fallthru
      _
    // Predicated region
    $region18: #{dqn_forward.1} parent=1 // pred_check
      _
    $region19: #{dqn_forward.1} parent=1 // pred_check_branch
      %31 = sbr.rel (0) target = $region21
    $region20: #{dqn_forward.1} parent=1 // pred_region
      _
    $region21: #{dqn_forward.1} parent=1 // pred_fallthru
      _
    // Predicated region
    $region22: #{dqn_forward.1} parent=1 // pred_check
      _
    $region23: #{dqn_forward.1} parent=1 // pred_check_branch
      %33 = sbr.rel (0) target = $region25
    $region24: #{dqn_forward.1} parent=1 // pred_region
      _
    $region25: #{dqn_forward.1} parent=1 // pred_fallthru
      _
    // Predicated region
    $region26: #{dqn_forward.1} parent=1 // pred_check
      _
    $region27: #{dqn_forward.1} parent=1 // pred_check_branch
      %35 = sbr.rel (0) target = $region29
    $region28: #{dqn_forward.1} parent=1 // pred_region
      %36 = dma.done [#allocation3], 4096
    $region29: #{dqn_forward.1} parent=1 // pred_fallthru
      _
    %v37 = vld [vmem:[%s0] sm:$0xff]
    %v38 = vld [vmem:[%s1] sm:$0xff]
    %v39 = vld [vmem:[%s1 + $0x8] sm:$0xff]
    %v40 = vld [vmem:[%s4] sm:$0x1]
    %v42 = vlaneseq
    %v43 = vshrl.u32 %v42, 7
    %v44 = vsub.s32 0, %v43
    %v45 = vrot.slane %v40, %v44
    %vm47 = vcmask 130048
    %v49 = vsel %vm47, %v37, 0
    %51 = vmatprep.subr.mxu0 0.0
    %52 = vmatpush1.msra.mxu0 %v38
    %53 = vmatprep.subr.mxu0 0.0
    %54 = vmatpush1.msra.mxu0 %v39
    %55 = vmatprep.subr.mxu0 0.0
    %56 = vmatpush1.msra.mxu0 0.0
    %57 = vmatprep.subr.mxu0 0.0
    %58 = vmatpush1.msra.mxu0 0.0
    %59 = vmatprep.subr.mxu0 0.0
    %60 = vmatpush1.msra.mxu0 0.0
    %61 = vmatprep.subr.mxu0 0.0
    %62 = vmatpush1.msra.mxu0 0.0
    %63 = vmatprep.subr.mxu0 0.0
    %64 = vmatpush1.msra.mxu0 0.0
    %65 = vmatprep.subr.mxu0 0.0
    %66 = vmatpush1.msra.mxu0 0.0
    %67 = vmatprep.subr.mxu0 0.0
    %68 = vmatpush1.msra.mxu0 0.0
    %69 = vmatprep.subr.mxu0 0.0
    %70 = vmatpush1.msra.mxu0 0.0
    %71 = vmatprep.subr.mxu0 0.0
    %72 = vmatpush1.msra.mxu0 0.0
    %73 = vmatprep.subr.mxu0 0.0
    %74 = vmatpush1.msra.mxu0 0.0
    %75 = vmatprep.subr.mxu0 0.0
    %76 = vmatpush1.msra.mxu0 0.0
    %77 = vmatprep.subr.mxu0 0.0
    %78 = vmatpush1.msra.mxu0 0.0
    %79 = vmatprep.subr.mxu0 0.0
    %80 = vmatpush1.msra.mxu0 0.0
    %81 = vmatprep.subr.mxu0 0.0
    %82 = vmatpush1.msra.mxu0 0.0
    %83 = vmatprep.subr.mxu0 0.0
    %84 = vmatpush1.msra.mxu0 0.0
    %85 = vmatprep.subr.mxu0 0.0
    %86 = vmatpush1.msra.mxu0 0.0
    %87 = vmatprep.subr.mxu0 0.0
    %88 = vmatpush1.msra.mxu0 0.0
    %89 = vmatprep.subr.mxu0 0.0
    %90 = vmatpush1.msra.mxu0 0.0
    %91 = vmatprep.subr.mxu0 0.0
    %92 = vmatpush1.msra.mxu0 0.0
    %93 = vmatprep.subr.mxu0 0.0
    %94 = vmatpush1.msra.mxu0 0.0
    %95 = vmatprep.subr.mxu0 0.0
    %96 = vmatpush1.msra.mxu0 0.0
    %97 = vmatprep.subr.mxu0 0.0
    %98 = vmatpush1.msra.mxu0 0.0
    %99 = vmatprep.subr.mxu0 0.0
    %100 = vmatpush1.msra.mxu0 0.0
    %101 = vmatprep.subr.mxu0 0.0
    %102 = vmatpush1.msra.mxu0 0.0
    %103 = vmatprep.subr.mxu0 0.0
    %104 = vmatpush1.msra.mxu0 0.0
    %105 = vmatprep.subr.mxu0 0.0
    %106 = vmatpush1.msra.mxu0 0.0
    %107 = vmatprep.subr.mxu0 0.0
    %108 = vmatpush1.msra.mxu0 0.0
    %109 = vmatprep.subr.mxu0 0.0
    %110 = vmatpush1.msra.mxu0 0.0
    %111 = vmatprep.subr.mxu0 0.0
    %112 = vmatpush1.msra.mxu0 0.0
    %113 = vmatprep.subr.mxu0 0.0
    %114 = vmatpush1.msra.mxu0 0.0
    %115 = vmatprep.mubr.f32.mxu0 0.0
    %116 = vmatmul.mubr.f32.gmra.mrb[0].mxu0 %v49
    %v117 = vpop.f32.mrb[0].mxu0
    %v118 = vadd.f32 %v45, %v117
    %v119 = vpop.f32.mrb[0].mxu0
    %120 = vdwg.mxu0
    %v121 = vmax.f32 %v118, 0.0
    %v122 = vld [vmem:[#allocation2] sm:$0xff]
    %v123 = vld [vmem:[#allocation2 + $0x8] sm:$0xff]
    %v124 = vld [vmem:[#allocation2 + $0x10] sm:$0xff]
    %v125 = vld [vmem:[#allocation2 + $0x18] sm:$0xff]
    %v126 = vld [vmem:[#allocation2 + $0x20] sm:$0xff]
    %v127 = vld [vmem:[#allocation2 + $0x28] sm:$0xff]
    %v128 = vld [vmem:[#allocation2 + $0x30] sm:$0xff]
    %v129 = vld [vmem:[#allocation2 + $0x38] sm:$0xff]
    %v130 = vld [vmem:[#allocation2 + $0x40] sm:$0xff]
    %v131 = vld [vmem:[#allocation2 + $0x48] sm:$0xff]
    %v132 = vld [vmem:[#allocation2 + $0x50] sm:$0xff]
    %v133 = vld [vmem:[#allocation2 + $0x58] sm:$0xff]
    %v134 = vld [vmem:[#allocation2 + $0x60] sm:$0xff]
    %v135 = vld [vmem:[#allocation2 + $0x68] sm:$0xff]
    %v136 = vld [vmem:[#allocation2 + $0x70] sm:$0xff]
    %v137 = vld [vmem:[#allocation2 + $0x78] sm:$0xff]
    %s138 = scalar_lea.vmem %s4, 1
    %v139 = vld [vmem:[%s138] sm:$0x1]
    %v141 = vlaneseq
    %v142 = vshrl.u32 %v141, 7
    %v143 = vsub.s32 0, %v142
    %v144 = vrot.slane %v139, %v143
    %146 = vmatprep.subr.mxu0 0.0
    %147 = vmatpush1.msra.mxu0 %v122
    %148 = vmatprep.subr.mxu0 0.0
    %149 = vmatpush1.msra.mxu0 %v123
    %150 = vmatprep.subr.mxu0 0.0
    %151 = vmatpush1.msra.mxu0 %v124
    %152 = vmatprep.subr.mxu0 0.0
    %153 = vmatpush1.msra.mxu0 %v125
    %154 = vmatprep.subr.mxu0 0.0
    %155 = vmatpush1.msra.mxu0 %v126
    %156 = vmatprep.subr.mxu0 0.0
    %157 = vmatpush1.msra.mxu0 %v127
    %158 = vmatprep.subr.mxu0 0.0
    %159 = vmatpush1.msra.mxu0 %v128
    %160 = vmatprep.subr.mxu0 0.0
    %161 = vmatpush1.msra.mxu0 %v129
    %162 = vmatprep.subr.mxu0 0.0
    %163 = vmatpush1.msra.mxu0 %v130
    %164 = vmatprep.subr.mxu0 0.0
    %165 = vmatpush1.msra.mxu0 %v131
    %166 = vmatprep.subr.mxu0 0.0
    %167 = vmatpush1.msra.mxu0 %v132
    %168 = vmatprep.subr.mxu0 0.0
    %169 = vmatpush1.msra.mxu0 %v133
    %170 = vmatprep.subr.mxu0 0.0
    %171 = vmatpush1.msra.mxu0 %v134
    %172 = vmatprep.subr.mxu0 0.0
    %173 = vmatpush1.msra.mxu0 %v135
    %174 = vmatprep.subr.mxu0 0.0
    %175 = vmatpush1.msra.mxu0 %v136
    %176 = vmatprep.subr.mxu0 0.0
    %177 = vmatpush1.msra.mxu0 %v137
    %178 = vmatprep.subr.mxu0 0.0
    %179 = vmatpush1.msra.mxu0 0.0
    %180 = vmatprep.subr.mxu0 0.0
    %181 = vmatpush1.msra.mxu0 0.0
    %182 = vmatprep.subr.mxu0 0.0
    %183 = vmatpush1.msra.mxu0 0.0
    %184 = vmatprep.subr.mxu0 0.0
    %185 = vmatpush1.msra.mxu0 0.0
    %186 = vmatprep.subr.mxu0 0.0
    %187 = vmatpush1.msra.mxu0 0.0
    %188 = vmatprep.subr.mxu0 0.0
    %189 = vmatpush1.msra.mxu0 0.0
    %190 = vmatprep.subr.mxu0 0.0
    %191 = vmatpush1.msra.mxu0 0.0
    %192 = vmatprep.subr.mxu0 0.0
    %193 = vmatpush1.msra.mxu0 0.0
    %194 = vmatprep.subr.mxu0 0.0
    %195 = vmatpush1.msra.mxu0 0.0
    %196 = vmatprep.subr.mxu0 0.0
    %197 = vmatpush1.msra.mxu0 0.0
    %198 = vmatprep.subr.mxu0 0.0
    %199 = vmatpush1.msra.mxu0 0.0
    %200 = vmatprep.subr.mxu0 0.0
    %201 = vmatpush1.msra.mxu0 0.0
    %202 = vmatprep.subr.mxu0 0.0
    %203 = vmatpush1.msra.mxu0 0.0
    %204 = vmatprep.subr.mxu0 0.0
    %205 = vmatpush1.msra.mxu0 0.0
    %206 = vmatprep.subr.mxu0 0.0
    %207 = vmatpush1.msra.mxu0 0.0
    %208 = vmatprep.subr.mxu0 0.0
    %209 = vmatpush1.msra.mxu0 0.0
    %210 = vmatprep.mubr.f32.mxu0 0.0
    %211 = vmatmul.mubr.f32.gmra.mrb[0].mxu0 %v121
    %v212 = vpop.f32.mrb[0].mxu0
    %v213 = vadd.f32 %v144, %v212
    %v214 = vpop.f32.mrb[0].mxu0
    %215 = vdwg.mxu0
    %v216 = vmax.f32 %v213, 0.0
    %s217 = scalar_lea.vmem [#allocation2], 128
    %v218 = vld [vmem:[%s217] sm:$0xff]
    %v219 = vld [vmem:[%s217 + $0x8] sm:$0xff]
    %v220 = vld [vmem:[%s217 + $0x10] sm:$0xff]
    %v221 = vld [vmem:[%s217 + $0x18] sm:$0xff]
    %v222 = vld [vmem:[%s217 + $0x20] sm:$0xff]
    %v223 = vld [vmem:[%s217 + $0x28] sm:$0xff]
    %v224 = vld [vmem:[%s217 + $0x30] sm:$0xff]
    %v225 = vld [vmem:[%s217 + $0x38] sm:$0xff]
    %v226 = vld [vmem:[%s217 + $0x40] sm:$0xff]
    %v227 = vld [vmem:[%s217 + $0x48] sm:$0xff]
    %v228 = vld [vmem:[%s217 + $0x50] sm:$0xff]
    %v229 = vld [vmem:[%s217 + $0x58] sm:$0xff]
    %v230 = vld [vmem:[%s217 + $0x60] sm:$0xff]
    %v231 = vld [vmem:[%s217 + $0x68] sm:$0xff]
    %v232 = vld [vmem:[%s217 + $0x70] sm:$0xff]
    %v233 = vld [vmem:[%s217 + $0x78] sm:$0xff]
    %s234 = scalar_lea.vmem %s4, 2
    %v235 = vld [vmem:[%s234] sm:$0x1]
    %v237 = vlaneseq
    %v238 = vshrl.u32 %v237, 7
    %v239 = vsub.s32 0, %v238
    %v240 = vrot.slane %v235, %v239
    %242 = vmatprep.subr.mxu0 0.0
    %243 = vmatpush1.msra.mxu0 %v218
    %244 = vmatprep.subr.mxu0 0.0
    %245 = vmatpush1.msra.mxu0 %v219
    %246 = vmatprep.subr.mxu0 0.0
    %247 = vmatpush1.msra.mxu0 %v220
    %248 = vmatprep.subr.mxu0 0.0
    %249 = vmatpush1.msra.mxu0 %v221
    %250 = vmatprep.subr.mxu0 0.0
    %251 = vmatpush1.msra.mxu0 %v222
    %252 = vmatprep.subr.mxu0 0.0
    %253 = vmatpush1.msra.mxu0 %v223
    %254 = vmatprep.subr.mxu0 0.0
    %255 = vmatpush1.msra.mxu0 %v224
    %256 = vmatprep.subr.mxu0 0.0
    %257 = vmatpush1.msra.mxu0 %v225
    %258 = vmatprep.subr.mxu0 0.0
    %259 = vmatpush1.msra.mxu0 %v226
    %260 = vmatprep.subr.mxu0 0.0
    %261 = vmatpush1.msra.mxu0 %v227
    %262 = vmatprep.subr.mxu0 0.0
    %263 = vmatpush1.msra.mxu0 %v228
    %264 = vmatprep.subr.mxu0 0.0
    %265 = vmatpush1.msra.mxu0 %v229
    %266 = vmatprep.subr.mxu0 0.0
    %267 = vmatpush1.msra.mxu0 %v230
    %268 = vmatprep.subr.mxu0 0.0
    %269 = vmatpush1.msra.mxu0 %v231
    %270 = vmatprep.subr.mxu0 0.0
    %271 = vmatpush1.msra.mxu0 %v232
    %272 = vmatprep.subr.mxu0 0.0
    %273 = vmatpush1.msra.mxu0 %v233
    %274 = vmatprep.subr.mxu0 0.0
    %275 = vmatpush1.msra.mxu0 0.0
    %276 = vmatprep.subr.mxu0 0.0
    %277 = vmatpush1.msra.mxu0 0.0
    %278 = vmatprep.subr.mxu0 0.0
    %279 = vmatpush1.msra.mxu0 0.0
    %280 = vmatprep.subr.mxu0 0.0
    %281 = vmatpush1.msra.mxu0 0.0
    %282 = vmatprep.subr.mxu0 0.0
    %283 = vmatpush1.msra.mxu0 0.0
    %284 = vmatprep.subr.mxu0 0.0
    %285 = vmatpush1.msra.mxu0 0.0
    %286 = vmatprep.subr.mxu0 0.0
    %287 = vmatpush1.msra.mxu0 0.0
    %288 = vmatprep.subr.mxu0 0.0
    %289 = vmatpush1.msra.mxu0 0.0
    %290 = vmatprep.subr.mxu0 0.0
    %291 = vmatpush1.msra.mxu0 0.0
    %292 = vmatprep.subr.mxu0 0.0
    %293 = vmatpush1.msra.mxu0 0.0
    %294 = vmatprep.subr.mxu0 0.0
    %295 = vmatpush1.msra.mxu0 0.0
    %296 = vmatprep.subr.mxu0 0.0
    %297 = vmatpush1.msra.mxu0 0.0
    %298 = vmatprep.subr.mxu0 0.0
    %299 = vmatpush1.msra.mxu0 0.0
    %300 = vmatprep.subr.mxu0 0.0
    %301 = vmatpush1.msra.mxu0 0.0
    %302 = vmatprep.subr.mxu0 0.0
    %303 = vmatpush1.msra.mxu0 0.0
    %304 = vmatprep.subr.mxu0 0.0
    %305 = vmatpush1.msra.mxu0 0.0
    %306 = vmatprep.mubr.f32.mxu0 0.0
    %307 = vmatmul.mubr.f32.gmra.mrb[0].mxu0 %v216
    %v308 = vpop.f32.mrb[0].mxu0
    %v309 = vadd.f32 %v240, %v308
    %v310 = vpop.f32.mrb[0].mxu0
    %311 = vdwg.mxu0
    %v312 = vmax.f32 %v309, 0.0
    %v313 = vld [vmem:[%s3] sm:$0xff]
    %v314 = vld [vmem:[%s3 + $0x8] sm:$0xff]
    %v315 = vld [vmem:[%s3 + $0x10] sm:$0xff]
    %v316 = vld [vmem:[%s3 + $0x18] sm:$0xff]
    %v317 = vld [vmem:[%s3 + $0x20] sm:$0xff]
    %v318 = vld [vmem:[%s3 + $0x28] sm:$0xff]
    %v319 = vld [vmem:[%s3 + $0x30] sm:$0xff]
    %v320 = vld [vmem:[%s3 + $0x38] sm:$0xff]
    %v321 = vld [vmem:[%s3 + $0x40] sm:$0xff]
    %v322 = vld [vmem:[%s3 + $0x48] sm:$0xff]
    %v323 = vld [vmem:[%s3 + $0x50] sm:$0xff]
    %v324 = vld [vmem:[%s3 + $0x58] sm:$0xff]
    %v325 = vld [vmem:[%s3 + $0x60] sm:$0xff]
    %v326 = vld [vmem:[%s3 + $0x68] sm:$0xff]
    %v327 = vld [vmem:[%s3 + $0x70] sm:$0xff]
    %v328 = vld [vmem:[%s3 + $0x78] sm:$0xff]
    %v329 = vld [vmem:[%s5] sm:$0x1]
    %v331 = vlaneseq
    %v332 = vshrl.u32 %v331, 7
    %v333 = vsub.s32 0, %v332
    %v334 = vrot.slane %v329, %v333
    %336 = vmatprep.subr.mxu0 0.0
    %337 = vmatpush1.msra.mxu0 %v313
    %338 = vmatprep.subr.mxu0 0.0
    %339 = vmatpush1.msra.mxu0 %v314
    %340 = vmatprep.subr.mxu0 0.0
    %341 = vmatpush1.msra.mxu0 %v315
    %342 = vmatprep.subr.mxu0 0.0
    %343 = vmatpush1.msra.mxu0 %v316
    %344 = vmatprep.subr.mxu0 0.0
    %345 = vmatpush1.msra.mxu0 %v317
    %346 = vmatprep.subr.mxu0 0.0
    %347 = vmatpush1.msra.mxu0 %v318
    %348 = vmatprep.subr.mxu0 0.0
    %349 = vmatpush1.msra.mxu0 %v319
    %350 = vmatprep.subr.mxu0 0.0
    %351 = vmatpush1.msra.mxu0 %v320
    %352 = vmatprep.subr.mxu0 0.0
    %353 = vmatpush1.msra.mxu0 %v321
    %354 = vmatprep.subr.mxu0 0.0
    %355 = vmatpush1.msra.mxu0 %v322
    %356 = vmatprep.subr.mxu0 0.0
    %357 = vmatpush1.msra.mxu0 %v323
    %358 = vmatprep.subr.mxu0 0.0
    %359 = vmatpush1.msra.mxu0 %v324
    %360 = vmatprep.subr.mxu0 0.0
    %361 = vmatpush1.msra.mxu0 %v325
    %362 = vmatprep.subr.mxu0 0.0
    %363 = vmatpush1.msra.mxu0 %v326
    %364 = vmatprep.subr.mxu0 0.0
    %365 = vmatpush1.msra.mxu0 %v327
    %366 = vmatprep.subr.mxu0 0.0
    %367 = vmatpush1.msra.mxu0 %v328
    %368 = vmatprep.subr.mxu0 0.0
    %369 = vmatpush1.msra.mxu0 0.0
    %370 = vmatprep.subr.mxu0 0.0
    %371 = vmatpush1.msra.mxu0 0.0
    %372 = vmatprep.subr.mxu0 0.0
    %373 = vmatpush1.msra.mxu0 0.0
    %374 = vmatprep.subr.mxu0 0.0
    %375 = vmatpush1.msra.mxu0 0.0
    %376 = vmatprep.subr.mxu0 0.0
    %377 = vmatpush1.msra.mxu0 0.0
    %378 = vmatprep.subr.mxu0 0.0
    %379 = vmatpush1.msra.mxu0 0.0
    %380 = vmatprep.subr.mxu0 0.0
    %381 = vmatpush1.msra.mxu0 0.0
    %382 = vmatprep.subr.mxu0 0.0
    %383 = vmatpush1.msra.mxu0 0.0
    %384 = vmatprep.subr.mxu0 0.0
    %385 = vmatpush1.msra.mxu0 0.0
    %386 = vmatprep.subr.mxu0 0.0
    %387 = vmatpush1.msra.mxu0 0.0
    %388 = vmatprep.subr.mxu0 0.0
    %389 = vmatpush1.msra.mxu0 0.0
    %390 = vmatprep.subr.mxu0 0.0
    %391 = vmatpush1.msra.mxu0 0.0
    %392 = vmatprep.subr.mxu0 0.0
    %393 = vmatpush1.msra.mxu0 0.0
    %394 = vmatprep.subr.mxu0 0.0
    %395 = vmatpush1.msra.mxu0 0.0
    %396 = vmatprep.subr.mxu0 0.0
    %397 = vmatpush1.msra.mxu0 0.0
    %398 = vmatprep.subr.mxu0 0.0
    %399 = vmatpush1.msra.mxu0 0.0
    %400 = vmatprep.mubr.f32.mxu0 0.0
    %401 = vmatmul.mubr.f32.gmra.mrb[0].mxu0 %v312
    %v402 = vpop.f32.mrb[0].mxu0
    %v403 = vadd.f32 %v334, %v402
    %v404 = vpop.f32.mrb[0].mxu0
    %405 = vdwg.mxu0
    %vm406 = vcmask 31744
    %407 = vst.msk [vmem:[%s6] sm:$0xff] %vm406, %v403
    // Predicated region
    $region30: #{dqn_forward.1} parent=1 // pred_check
      _
    $region31: #{dqn_forward.1} parent=1 // pred_check_branch
      %409 = sbr.rel (0) target = $region33
    $region32: #{dqn_forward.1} parent=1 // pred_region
      _
    $region33: #{dqn_forward.1} parent=1 // pred_fallthru
      _
    // Predicated region
    $region34: #{dqn_forward.1} parent=1 // pred_check
      _
    $region35: #{dqn_forward.1} parent=1 // pred_check_branch
      %411 = sbr.rel (0) target = $region37
    $region36: #{dqn_forward.1} parent=1 // pred_region
      _
    $region37: #{dqn_forward.1} parent=1 // pred_fallthru
      _
    %412 = vsyncpa [#allocation3], 1

</llo_original>
